<compile_context>
chip_gen: v7x
topology: tpu7x:2x2x1
jax: 0.10.0
libtpu: 0.0.40
codegen_flags: <defaults>
</compile_context>

<pallas_src>
import functools

import jax
import jax.numpy as jnp
from jax.experimental import pallas as pl
from jax.experimental.pallas import tpu as pltpu

LN_EPS = 1e-5  # nn.LayerNorm default


def _sgu_kernel(pos_ref, value_ref, mask_ref, weight_ref, bias_ref,
                impute_ref, gamma_ref, beta_ref,
                gated_ref, gate_ref, *, heads, dh, batch_block):
    w = weight_ref[...].astype(jnp.float32)          # (H, N, N)
    bias = bias_ref[...].astype(jnp.float32)         # (H, N, 1)
    imp = impute_ref[...].astype(jnp.float32)        # (H, N, E, Dh)
    gamma = gamma_ref[...].astype(jnp.float32)       # (1, D)
    beta = beta_ref[...].astype(jnp.float32)         # (1, D)

    for b in range(batch_block):                     # static unroll over batches in block
        g = pos_ref[b].astype(jnp.float32)           # (N, D)   gate = pos
        v = value_ref[b].astype(jnp.float32)         # (N, D)   res  = value
        rm = 1.0 - mask_ref[b].astype(jnp.float32)   # (N, E)   rerange_mask (same per head)

        # --- LayerNorm over the full channel dim D (before head split) ---
        mu = jnp.mean(g, axis=-1, keepdims=True)
        var = jnp.mean((g - mu) ** 2, axis=-1, keepdims=True)
        gn = (g - mu) * jax.lax.rsqrt(var + LN_EPS)
        gn = gn * gamma + beta                       # (N, D)

        # --- mask-bias for ALL heads at once (hoisted out of the head loop) ---
        # mb_all[h, n, m] = sum_e rm[n, e] * impute_bia[h, n, e, m]
        mb_all = jnp.sum(rm[None, :, :, None] * imp, axis=2)        # (H, N, Dh)

        # --- fuse: W @ gh + W @ mb  ==  W @ (gh + mb) ---
        x_all = jnp.concatenate(
            [(gn[:, h * dh:(h + 1) * dh] + mb_all[h])[None] for h in range(heads)],
            axis=0)                                                  # (H, N, Dh)

        # --- single batched MXU contraction over heads ---
        # gate[h, m, d] = sum_n W[h, m, n] * X[h, n, d]
        gate_all = jnp.einsum('hmn,hnd->hmd', w, x_all,
                              preferred_element_type=jnp.float32)    # (H, N, Dh)
        gate_all = gate_all + bias                                   # bias broadcasts over d

        # --- write each head slice directly (no lane-axis concatenate) ---
        for h in range(heads):
            g_h = gate_all[h]                                        # (N, Dh)
            v_h = v[:, h * dh:(h + 1) * dh]                          # (N, Dh)
            gate_ref[b, :, h * dh:(h + 1) * dh] = g_h.astype(gate_ref.dtype)
            # act = Identity
            gated_ref[b, :, h * dh:(h + 1) * dh] = (g_h * v_h).astype(gated_ref.dtype)


def spatial_gating_unit(value, pos, x_mask, weight, bias, impute_bia,
                        ln_gamma, ln_beta, gate_res=None, num_batch_blocks=None):
    B, N, D = value.shape
    H = weight.shape[0]
    E = x_mask.shape[-1]
    Dh = D // H

    # Grid: at most 2 batch-blocks.
    #  - v5e/v6e (single TensorCore): 1-2 grid steps => negligible pipeline overhead,
    #    everything fits in one/two invocations.
    #  - v7x (2 TensorCores): 2 "parallel" steps shard half the batch per core.
    if num_batch_blocks is None:
        num_batch_blocks = 2 if (B > 1 and B % 2 == 0) else 1
    assert B % num_batch_blocks == 0, "batch must divide evenly into batch blocks"
    bb = B // num_batch_blocks

    # TODO(synk): for production-sized N (weight = H*N*N f32 fully resident) add an
    # m-tile grid axis over the output sequence dim so the weight BlockSpec only
    # holds an (H, tm, N) slab (v7x has 64 MiB VMEM; scoped default is 32 MiB).

    kernel = functools.partial(_sgu_kernel, heads=H, dh=Dh, batch_block=bb)

    gated, gate = pl.pallas_call(
        kernel,
        out_shape=(jax.ShapeDtypeStruct((B, N, D), value.dtype),
                   jax.ShapeDtypeStruct((B, N, D), value.dtype)),
        grid_spec=pltpu.PrefetchScalarGridSpec(
            num_scalar_prefetch=0,
            grid=(num_batch_blocks,),
            in_specs=[
                pl.BlockSpec((bb, N, D), lambda i: (i, 0, 0)),           # pos (gate)
                pl.BlockSpec((bb, N, D), lambda i: (i, 0, 0)),           # value (res)
                pl.BlockSpec((bb, N, E), lambda i: (i, 0, 0)),           # x_mask
                pl.BlockSpec((H, N, N), lambda i: (0, 0, 0)),            # weight
                pl.BlockSpec((H, N, 1), lambda i: (0, 0, 0)),            # bias (H,N,1)
                pl.BlockSpec((H, N, E, Dh), lambda i: (0, 0, 0, 0)),     # impute_bia
                pl.BlockSpec((1, D), lambda i: (0, 0)),                  # LN gamma
                pl.BlockSpec((1, D), lambda i: (0, 0)),                  # LN beta
            ],
            out_specs=[
                pl.BlockSpec((bb, N, D), lambda i: (i, 0, 0)),           # act(gate)*res
                pl.BlockSpec((bb, N, D), lambda i: (i, 0, 0)),           # gate
            ],
        ),
        compiler_params=pltpu.CompilerParams(dimension_semantics=("parallel",)),
    )(pos, value, x_mask, weight, bias.reshape(H, N, 1), impute_bia,
      ln_gamma.reshape(1, D), ln_beta.reshape(1, D))

    if gate_res is not None:
        # TODO(synk): gate_res path handled in plain JAX (module default is None).
        gate = gate + gate_res
        gated = gate * value

    return gated, gate, x_mask


def _reference(value, pos, x_mask, weight, bias, impute_bia, gamma, beta):
    """Pure-JAX reference mirroring the PyTorch forward."""
    B, N, D = value.shape
    H = weight.shape[0]
    Dh = D // H
    mu = jnp.mean(pos, -1, keepdims=True)
    var = jnp.mean((pos - mu) ** 2, -1, keepdims=True)
    gn = (pos - mu) / jnp.sqrt(var + LN_EPS) * gamma + beta
    rm = 1.0 - jnp.repeat(x_mask[:, None], H, axis=1)                  # (B,H,N,E)
    mask_bias = jnp.einsum('bhne,hnem->bhnm', rm, impute_bia)          # (B,H,N,Dh)
    mask_gate = jnp.einsum('bhnd,hmn->bhmd', mask_bias, weight)        # (B,H,N,Dh)
    gh = gn.reshape(B, N, H, Dh).transpose(0, 2, 1, 3)                 # (B,H,N,Dh)
    gate = jnp.einsum('bhnd,hmn->bhmd', gh, weight)
    gate = gate + bias[None, :, :, None] + mask_gate
    gate = gate.transpose(0, 2, 1, 3).reshape(B, N, D)
    return gate * value, gate


if __name__ == "__main__":
    # Small shapes consistent with the module: dim=32, dim_seq=16, heads=2, enc_in=7
    B, N, D, H, E = 2, 16, 32, 2, 7
    Dh = D // H

    key = jax.random.PRNGKey(0)
    k_val, k_pos, k_mask, k_w, k_imp = jax.random.split(key, 5)

    value = jax.random.normal(k_val, (B, N, D), jnp.float32)
    pos = jax.random.normal(k_pos, (B, N, D), jnp.float32)
    x_mask = (jax.random.uniform(k_mask, (B, N, E)) < 0.8).astype(jnp.float32)

    # Deterministic parameter init mirroring __init__:
    init_eps = 0.001 / N
    weight = jax.random.uniform(k_w, (H, N, N), jnp.float32,
                                minval=-init_eps, maxval=init_eps)
    bias = jnp.ones((H, N), jnp.float32)
    impute_bia = jax.random.normal(k_imp, (H, N, E, Dh), jnp.float32)
    ln_gamma = jnp.ones((D,), jnp.float32)
    ln_beta = jnp.zeros((D,), jnp.float32)

    gated, gate, mask_out = spatial_gating_unit(
        value, pos, x_mask, weight, bias, impute_bia, ln_gamma, ln_beta)
    jax.block_until_ready((gated, gate, mask_out))

    ref_gated, ref_gate = _reference(
        value, pos, x_mask, weight, bias, impute_bia, ln_gamma, ln_beta)

    assert jnp.allclose(gated, ref_gated, atol=1e-4, rtol=1e-4), "gated mismatch"
    assert jnp.allclose(gate, ref_gate, atol=1e-4, rtol=1e-4), "gate mismatch"
    assert jnp.array_equal(mask_out, x_mask), "mask passthrough mismatch"

    print("KERNEL_OK")
</pallas_src>

<mosaic_0001>
module attributes {stable_mosaic.version = 11 : i64} {
  func.func @_sgu_kernel(%arg0: i32, %arg1: memref<1x16x32xf32, #tpu.memory_space<vmem>>, %arg2: memref<1x16x32xf32, #tpu.memory_space<vmem>>, %arg3: memref<1x16x7xf32, #tpu.memory_space<vmem>>, %arg4: memref<2x16x16xf32, #tpu.memory_space<vmem>>, %arg5: memref<2x16x1xf32, #tpu.memory_space<vmem>>, %arg6: memref<2x16x7x16xf32, #tpu.memory_space<vmem>>, %arg7: memref<1x32xf32, #tpu.memory_space<vmem>>, %arg8: memref<1x32xf32, #tpu.memory_space<vmem>>, %arg9: memref<1x16x32xf32, #tpu.memory_space<vmem>>, %arg10: memref<1x16x32xf32, #tpu.memory_space<vmem>>) attributes {dimension_semantics = [#tpu.dimension_semantics<parallel>], iteration_bounds = array<i64: 2>, scalar_prefetch = 0 : i64, scratch_operands = 0 : i64, tpu.core_type = #tpu.core_type<tc>, window_params = [{transform_indices = @transform_0, window_bounds = array<i64: 1, 16, 32>}, {transform_indices = @transform_1, window_bounds = array<i64: 1, 16, 32>}, {transform_indices = @transform_2, window_bounds = array<i64: 1, 16, 7>}, {pipeline_mode = #tpu.pipeline_mode<synchronous>, transform_indices = @transform_3, window_bounds = array<i64: 2, 16, 16>}, {pipeline_mode = #tpu.pipeline_mode<synchronous>, transform_indices = @transform_4, window_bounds = array<i64: 2, 16, 1>}, {pipeline_mode = #tpu.pipeline_mode<synchronous>, transform_indices = @transform_5, window_bounds = array<i64: 2, 16, 7, 16>}, {pipeline_mode = #tpu.pipeline_mode<synchronous>, transform_indices = @transform_6, window_bounds = array<i64: 1, 32>}, {pipeline_mode = #tpu.pipeline_mode<synchronous>, transform_indices = @transform_7, window_bounds = array<i64: 1, 32>}, {transform_indices = @transform_8, window_bounds = array<i64: 1, 16, 32>}, {transform_indices = @transform_9, window_bounds = array<i64: 1, 16, 32>}]} {
    %c0 = arith.constant 0 : index
    %c0_0 = arith.constant 0 : index
    %c0_1 = arith.constant 0 : index
    %0 = vector.load %arg4[%c0, %c0_0, %c0_1] : memref<2x16x16xf32, #tpu.memory_space<vmem>>, vector<2x16x16xf32>
    %c0_2 = arith.constant 0 : index
    %c0_3 = arith.constant 0 : index
    %c0_4 = arith.constant 0 : index
    %1 = vector.load %arg5[%c0_2, %c0_3, %c0_4] : memref<2x16x1xf32, #tpu.memory_space<vmem>>, vector<2x16x1xf32>
    %c0_5 = arith.constant 0 : index
    %c0_6 = arith.constant 0 : index
    %c0_7 = arith.constant 0 : index
    %c0_8 = arith.constant 0 : index
    %2 = vector.load %arg6[%c0_5, %c0_6, %c0_7, %c0_8] : memref<2x16x7x16xf32, #tpu.memory_space<vmem>>, vector<2x16x7x16xf32>
    %c0_9 = arith.constant 0 : index
    %c0_10 = arith.constant 0 : index
    %3 = vector.load %arg7[%c0_9, %c0_10] : memref<1x32xf32, #tpu.memory_space<vmem>>, vector<1x32xf32>
    %c0_11 = arith.constant 0 : index
    %c0_12 = arith.constant 0 : index
    %4 = vector.load %arg8[%c0_11, %c0_12] : memref<1x32xf32, #tpu.memory_space<vmem>>, vector<1x32xf32>
    %c0_13 = arith.constant 0 : index
    %c0_14 = arith.constant 0 : index
    %c0_15 = arith.constant 0 : index
    %5 = vector.load %arg1[%c0_13, %c0_14, %c0_15] : memref<1x16x32xf32, #tpu.memory_space<vmem>>, vector<1x16x32xf32>
    %6 = vector.shape_cast %5 : vector<1x16x32xf32> to vector<16x32xf32>
    %c0_16 = arith.constant 0 : index
    %c0_17 = arith.constant 0 : index
    %c0_18 = arith.constant 0 : index
    %7 = vector.load %arg2[%c0_16, %c0_17, %c0_18] : memref<1x16x32xf32, #tpu.memory_space<vmem>>, vector<1x16x32xf32>
    %8 = vector.shape_cast %7 : vector<1x16x32xf32> to vector<16x32xf32>
    %c0_19 = arith.constant 0 : index
    %c0_20 = arith.constant 0 : index
    %c0_21 = arith.constant 0 : index
    %9 = vector.load %arg3[%c0_19, %c0_20, %c0_21] : memref<1x16x7xf32, #tpu.memory_space<vmem>>, vector<1x16x7xf32>
    %10 = vector.shape_cast %9 : vector<1x16x7xf32> to vector<16x7xf32>
    %cst = arith.constant 1.000000e+00 : f32
    %11 = vector.broadcast %cst : f32 to vector<16x7xf32>
    %12 = arith.subf %11, %10 : vector<16x7xf32>
    %cst_22 = arith.constant dense<0.000000e+00> : vector<16xf32>
    %13 = vector.multi_reduction <add>, %6, %cst_22 [1] : vector<16x32xf32> to vector<16xf32>
    %14 = vector.shape_cast %13 : vector<16xf32> to vector<16x1xf32>
    %cst_23 = arith.constant 3.200000e+01 : f32
    %15 = vector.broadcast %cst_23 : f32 to vector<16x1xf32>
    %16 = arith.divf %14, %15 : vector<16x1xf32>
    %17 = vector.broadcast %16 : vector<16x1xf32> to vector<16x32xf32>
    %18 = arith.subf %6, %17 : vector<16x32xf32>
    %19 = arith.mulf %18, %18 : vector<16x32xf32>
    %cst_24 = arith.constant dense<0.000000e+00> : vector<16xf32>
    %20 = vector.multi_reduction <add>, %19, %cst_24 [1] : vector<16x32xf32> to vector<16xf32>
    %21 = vector.shape_cast %20 : vector<16xf32> to vector<16x1xf32>
    %cst_25 = arith.constant 3.200000e+01 : f32
    %22 = vector.broadcast %cst_25 : f32 to vector<16x1xf32>
    %23 = arith.divf %21, %22 : vector<16x1xf32>
    %24 = vector.broadcast %16 : vector<16x1xf32> to vector<16x32xf32>
    %25 = arith.subf %6, %24 : vector<16x32xf32>
    %cst_26 = arith.constant 9.99999974E-6 : f32
    %26 = vector.broadcast %cst_26 : f32 to vector<16x1xf32>
    %27 = arith.addf %23, %26 : vector<16x1xf32>
    %28 = math.rsqrt %27 : vector<16x1xf32>
    %29 = vector.broadcast %28 : vector<16x1xf32> to vector<16x32xf32>
    %30 = arith.mulf %25, %29 : vector<16x32xf32>
    %31 = vector.broadcast %3 : vector<1x32xf32> to vector<16x32xf32>
    %32 = arith.mulf %30, %31 : vector<16x32xf32>
    %33 = vector.broadcast %4 : vector<1x32xf32> to vector<16x32xf32>
    %34 = arith.addf %32, %33 : vector<16x32xf32>
    %35 = vector.shape_cast %12 : vector<16x7xf32> to vector<1x16x7x1xf32>
    %36 = vector.broadcast %35 : vector<1x16x7x1xf32> to vector<2x16x7x16xf32>
    %37 = arith.mulf %36, %2 : vector<2x16x7x16xf32>
    %cst_27 = arith.constant dense<0.000000e+00> : vector<2x16x16xf32>
    %38 = vector.multi_reduction <add>, %37, %cst_27 [2] : vector<2x16x7x16xf32> to vector<2x16x16xf32>
    %39 = vector.extract_strided_slice %34 {offsets = [0, 0], sizes = [16, 16], strides = [1, 1]} : vector<16x32xf32> to vector<16x16xf32>
    %40 = vector.extract_strided_slice %38 {offsets = [0, 0, 0], sizes = [1, 16, 16], strides = [1, 1, 1]} : vector<2x16x16xf32> to vector<1x16x16xf32>
    %41 = vector.shape_cast %40 : vector<1x16x16xf32> to vector<16x16xf32>
    %42 = arith.addf %39, %41 : vector<16x16xf32>
    %43 = vector.shape_cast %42 : vector<16x16xf32> to vector<1x16x16xf32>
    %44 = vector.extract_strided_slice %34 {offsets = [0, 16], sizes = [16, 16], strides = [1, 1]} : vector<16x32xf32> to vector<16x16xf32>
    %45 = vector.extract_strided_slice %38 {offsets = [1, 0, 0], sizes = [1, 16, 16], strides = [1, 1, 1]} : vector<2x16x16xf32> to vector<1x16x16xf32>
    %46 = vector.shape_cast %45 : vector<1x16x16xf32> to vector<16x16xf32>
    %47 = arith.addf %44, %46 : vector<16x16xf32>
    %48 = vector.shape_cast %47 : vector<16x16xf32> to vector<1x16x16xf32>
    %49 = tpu.concatenate %43, %48 in 0 : vector<1x16x16xf32>, vector<1x16x16xf32> -> vector<2x16x16xf32>
    "tpu.trace_start"() <{level = 10 : i32, message = "hmn,hnd->hmd"}> : () -> ()
    %cst_28 = arith.constant dense<0.000000e+00> : vector<2x16x16xf32>
    %50 = tpu.matmul %0, %49, %cst_28 {dimension_numbers = #tpu.dot_dimension_numbers<[2], [1], [1], [2], [0, 0, 0, 1, 1, 2], [0], [0]>} : vector<2x16x16xf32>, vector<2x16x16xf32>, vector<2x16x16xf32> -> vector<2x16x16xf32>
    "tpu.trace_stop"() : () -> ()
    %51 = vector.broadcast %1 : vector<2x16x1xf32> to vector<2x16x16xf32>
    %52 = arith.addf %50, %51 : vector<2x16x16xf32>
    %53 = vector.extract_strided_slice %52 {offsets = [0, 0, 0], sizes = [1, 16, 16], strides = [1, 1, 1]} : vector<2x16x16xf32> to vector<1x16x16xf32>
    %54 = vector.shape_cast %53 : vector<1x16x16xf32> to vector<16x16xf32>
    %55 = vector.extract_strided_slice %8 {offsets = [0, 0], sizes = [16, 16], strides = [1, 1]} : vector<16x32xf32> to vector<16x16xf32>
    %c0_29 = arith.constant 0 : index
    %c0_30 = arith.constant 0 : index
    %c0_31 = arith.constant 0 : index
    %56 = vector.load %arg10[%c0_29, %c0_30, %c0_31] : memref<1x16x32xf32, #tpu.memory_space<vmem>>, vector<1x16x16xf32>
    %57 = vector.shape_cast %56 : vector<1x16x16xf32> to vector<16x16xf32>
    %58 = vector.shape_cast %54 : vector<16x16xf32> to vector<1x16x16xf32>
    tpu.vector_store %arg10[%c0_29, %c0_30, %c0_31], %58 {strides = array<i32>} : memref<1x16x32xf32, #tpu.memory_space<vmem>>, vector<1x16x16xf32>,
    %59 = arith.mulf %54, %55 : vector<16x16xf32>
    %c0_32 = arith.constant 0 : index
    %c0_33 = arith.constant 0 : index
    %c0_34 = arith.constant 0 : index
    %60 = vector.load %arg9[%c0_32, %c0_33, %c0_34] : memref<1x16x32xf32, #tpu.memory_space<vmem>>, vector<1x16x16xf32>
    %61 = vector.shape_cast %60 : vector<1x16x16xf32> to vector<16x16xf32>
    %62 = vector.shape_cast %59 : vector<16x16xf32> to vector<1x16x16xf32>
    tpu.vector_store %arg9[%c0_32, %c0_33, %c0_34], %62 {strides = array<i32>} : memref<1x16x32xf32, #tpu.memory_space<vmem>>, vector<1x16x16xf32>,
    %63 = vector.extract_strided_slice %52 {offsets = [1, 0, 0], sizes = [1, 16, 16], strides = [1, 1, 1]} : vector<2x16x16xf32> to vector<1x16x16xf32>
    %64 = vector.shape_cast %63 : vector<1x16x16xf32> to vector<16x16xf32>
    %65 = vector.extract_strided_slice %8 {offsets = [0, 16], sizes = [16, 16], strides = [1, 1]} : vector<16x32xf32> to vector<16x16xf32>
    %c0_35 = arith.constant 0 : index
    %c0_36 = arith.constant 0 : index
    %c16 = arith.constant 16 : index
    %66 = vector.load %arg10[%c0_35, %c0_36, %c16] : memref<1x16x32xf32, #tpu.memory_space<vmem>>, vector<1x16x16xf32>
    %67 = vector.shape_cast %66 : vector<1x16x16xf32> to vector<16x16xf32>
    %68 = vector.shape_cast %64 : vector<16x16xf32> to vector<1x16x16xf32>
    tpu.vector_store %arg10[%c0_35, %c0_36, %c16], %68 {strides = array<i32>} : memref<1x16x32xf32, #tpu.memory_space<vmem>>, vector<1x16x16xf32>,
    %69 = arith.mulf %64, %65 : vector<16x16xf32>
    %c0_37 = arith.constant 0 : index
    %c0_38 = arith.constant 0 : index
    %c16_39 = arith.constant 16 : index
    %70 = vector.load %arg9[%c0_37, %c0_38, %c16_39] : memref<1x16x32xf32, #tpu.memory_space<vmem>>, vector<1x16x16xf32>
    %71 = vector.shape_cast %70 : vector<1x16x16xf32> to vector<16x16xf32>
    %72 = vector.shape_cast %69 : vector<16x16xf32> to vector<1x16x16xf32>
    tpu.vector_store %arg9[%c0_37, %c0_38, %c16_39], %72 {strides = array<i32>} : memref<1x16x32xf32, #tpu.memory_space<vmem>>, vector<1x16x16xf32>,
    return
  }
  func.func @transform_0(%arg0: i32) -> (i32, i32, i32) {
    %c0_i32 = arith.constant 0 : i32
    %c0_i32_0 = arith.constant 0 : i32
    %c0_i32_1 = arith.constant 0 : i32
    return %arg0, %c0_i32, %c0_i32_0 : i32, i32, i32
  }
  func.func @transform_1(%arg0: i32) -> (i32, i32, i32) {
    %c0_i32 = arith.constant 0 : i32
    %c0_i32_0 = arith.constant 0 : i32
    %c0_i32_1 = arith.constant 0 : i32
    return %arg0, %c0_i32, %c0_i32_0 : i32, i32, i32
  }
  func.func @transform_2(%arg0: i32) -> (i32, i32, i32) {
    %c0_i32 = arith.constant 0 : i32
    %c0_i32_0 = arith.constant 0 : i32
    %c0_i32_1 = arith.constant 0 : i32
    return %arg0, %c0_i32, %c0_i32_0 : i32, i32, i32
  }
  func.func @transform_3(%arg0: i32) -> (i32, i32, i32) {
    %c0_i32 = arith.constant 0 : i32
    %c0_i32_0 = arith.constant 0 : i32
    %c0_i32_1 = arith.constant 0 : i32
    %c0_i32_2 = arith.constant 0 : i32
    return %c0_i32, %c0_i32_0, %c0_i32_1 : i32, i32, i32
  }
  func.func @transform_4(%arg0: i32) -> (i32, i32, i32) {
    %c0_i32 = arith.constant 0 : i32
    %c0_i32_0 = arith.constant 0 : i32
    %c0_i32_1 = arith.constant 0 : i32
    %c0_i32_2 = arith.constant 0 : i32
    return %c0_i32, %c0_i32_0, %c0_i32_1 : i32, i32, i32
  }
  func.func @transform_5(%arg0: i32) -> (i32, i32, i32, i32) {
    %c0_i32 = arith.constant 0 : i32
    %c0_i32_0 = arith.constant 0 : i32
    %c0_i32_1 = arith.constant 0 : i32
    %c0_i32_2 = arith.constant 0 : i32
    %c0_i32_3 = arith.constant 0 : i32
    return %c0_i32, %c0_i32_0, %c0_i32_1, %c0_i32_2 : i32, i32, i32, i32
  }
  func.func @transform_6(%arg0: i32) -> (i32, i32) {
    %c0_i32 = arith.constant 0 : i32
    %c0_i32_0 = arith.constant 0 : i32
    %c0_i32_1 = arith.constant 0 : i32
    return %c0_i32, %c0_i32_0 : i32, i32
  }
  func.func @transform_7(%arg0: i32) -> (i32, i32) {
    %c0_i32 = arith.constant 0 : i32
    %c0_i32_0 = arith.constant 0 : i32
    %c0_i32_1 = arith.constant 0 : i32
    return %c0_i32, %c0_i32_0 : i32, i32
  }
  func.func @transform_8(%arg0: i32) -> (i32, i32, i32) {
    %c0_i32 = arith.constant 0 : i32
    %c0_i32_0 = arith.constant 0 : i32
    %c0_i32_1 = arith.constant 0 : i32
    return %arg0, %c0_i32, %c0_i32_0 : i32, i32, i32
  }
  func.func @transform_9(%arg0: i32) -> (i32, i32, i32) {
    %c0_i32 = arith.constant 0 : i32
    %c0_i32_0 = arith.constant 0 : i32
    %c0_i32_1 = arith.constant 0 : i32
    return %arg0, %c0_i32, %c0_i32_0 : i32, i32, i32
  }
}

</mosaic_0001>

<llo_original>
// kernel: tpu_custom_call.1
$region0: #{tpu_custom_call.1}
  #allocation0 [shape = 'u32[]', space=smem, size = 0x4, offset = 0x4, fixed_abs, tag = 'smem constant byte address 0x4 - core index']
  #allocation1 [shape = 'u32[144,128]{1,0:T(1,128)}', space=vmem, size = 0x12000, scoped, tag = 'internal scratch']
  %s0 = inlined_call_operand.vmem [shape: f32[2,16,32], index: 0, kind: input, shape index: {}]
  %s1 = inlined_call_operand.vmem [shape: f32[2,16,32], index: 1, kind: input, shape index: {}]
  %s2 = inlined_call_operand.vmem [shape: f32[2,16,7], index: 2, kind: input, shape index: {}]
  %s3 = inlined_call_operand.vmem [shape: f32[2,16,16], index: 3, kind: input, shape index: {}]
  %s4 = inlined_call_operand.vmem [shape: f32[2,16,1], index: 4, kind: input, shape index: {}]
  %s5 = inlined_call_operand.vmem [shape: f32[2,16,7,16], index: 5, kind: input, shape index: {}]
  %s6 = inlined_call_operand.vmem [shape: f32[1,32], index: 6, kind: input, shape index: {}]
  %s7 = inlined_call_operand.vmem [shape: f32[1,32], index: 7, kind: input, shape index: {}]
  %s8 = inlined_call_operand.hbm [shape: f32[2,16,32], index: 8, kind: output, shape index: {0}]
  %s9 = inlined_call_operand.hbm [shape: f32[2,16,32], index: 9, kind: output, shape index: {1}]
  %10 = xla_tuple %s8, %s9
  %s11 = sld [smem:[#allocation0]]
  $region73: #{tpu_custom_call.1} parent=0
    _
  %s13 = ssub.s32 1, %s11
  %s14 = scalar_select 0, %s13, %s11
  $region1: #{tpu_custom_call.1} parent=0
    #allocation2 [shape = 'u8[16384]{0}', space=vmem, size = 0x4000, scoped, tag = 'output window, operand 0']
    #allocation3 [shape = 's32[2]{0}', space=sflag, size = 0x8, scoped, tag = 'scoped memory for tpu_custom_call.1']
    #allocation4 [shape = 'u8[16384]{0}', space=vmem, size = 0x4000, scoped, tag = 'output window, operand 1']
    #allocation5 [shape = 's32[2]{0}', space=sflag, size = 0x8, scoped, tag = 'scoped memory for tpu_custom_call.1']
    %15 = vsyncpa [#allocation3], 0
    %s16 = scalar_lea.sflag [#allocation3], 1
    %17 = vsyncpa %s16, 0
    %18 = vsyncpa [#allocation5], 0
    %s19 = scalar_lea.sflag [#allocation5], 1
    %20 = vsyncpa %s19, 0
    loop: start=0, step=1, limit=4
    $region2: #{tpu_custom_call.1} parent=1 // loop_pre_header
      _
    $region3: #{tpu_custom_call.1} parent=1 // loop_header
      %s22 = sphi 0, %s26
      %p23 = scmp.ge.s32.totalorder %s22, 4
      %s32 = sphi 0, %s34
      %s35 = sphi 0, %s32
      %s36 = sphi 0, %s35
      %s52 = sphi 0, %s36
      %s58 = sphi 0, %s60
      %s61 = sphi 0, %s58
      %s62 = sphi 0, %s61
      %s78 = sphi 0, %s62
      %s84 = sphi 0, %s86
      %s87 = sphi 0, %s84
      %s88 = sphi 0, %s87
      %s104 = sphi 0, %s88
      %s108 = sphi 0, %s108
      %s110 = sphi 0, %s108
      %s111 = sphi 0, %s110
      %s125 = sphi 0, %s111
      %s129 = sphi 0, %s129
      %s131 = sphi 0, %s129
      %s132 = sphi 0, %s131
      %s146 = sphi 0, %s132
      %s150 = sphi 0, %s150
      %s152 = sphi 0, %s150
      %s153 = sphi 0, %s152
      %s167 = sphi 0, %s153
      %s171 = sphi 0, %s171
      %s173 = sphi 0, %s171
      %s174 = sphi 0, %s173
      %s188 = sphi 0, %s174
      %s192 = sphi 0, %s192
      %s194 = sphi 0, %s192
      %s195 = sphi 0, %s194
      %s209 = sphi 0, %s195
      %s215 = sphi 0, %s217
      %s218 = sphi 0, %s215
      %s219 = sphi 0, %s218
      %s235 = sphi 0, %s219
      %s241 = sphi 0, %s243
      %s244 = sphi 0, %s241
      %s245 = sphi 0, %s244
      %s261 = sphi 0, %s245
    $region4: #{tpu_custom_call.1} parent=1 // loop_header_branch
      %25 = sbr.rel (%p23) target = $region8
    $region5: #{tpu_custom_call.1} parent=1 // loop_body
      %s27 = ssub.s32 %s22, 1
      %s28 = ssub.s32 %s22, 2
      %s29 = sadd.s32 %s22, 1
      %s30 = ssub.s32 %s22, %s29
      %p31 = scmp.eq.s32.totalorder %s30, 0
      %s33 = sadd.s32 %s32, 1
      %s34 = scalar_select %p31, %s32, %s33
      %p37 = pneg %p31
      %p38 = scmp.eq.s32.totalorder %s22, 1
      %p39 = por %p37, %p38
      %p40 = scmp.ne.s32.totalorder %s32, %s35
      %p41 = scmp.eq.s32.totalorder %s22, 0
      %p42 = por %p40, %p41
      %p43 = scmp.ne.s32.totalorder %s32, %s35
      %p44 = scmp.eq.s32.totalorder %s27, 1
      %p45 = por %p43, %p44
      %p46 = scmp.ne.s32.totalorder %s35, %s36
      %p47 = scmp.eq.s32.totalorder %s27, 0
      %p48 = por %p46, %p47
      %p49 = scmp.ne.s32.totalorder %s35, %s36
      %p50 = scmp.eq.s32.totalorder %s28, 1
      %p51 = por %p49, %p50
      %p53 = scmp.ne.s32.totalorder %s36, %s52
      %p54 = scmp.eq.s32.totalorder %s28, 0
      %p55 = por %p53, %p54
      %s56 = ssub.s32 %s22, %s29
      %p57 = scmp.eq.s32.totalorder %s56, 0
      %s59 = sadd.s32 %s58, 1
      %s60 = scalar_select %p57, %s58, %s59
      %p63 = pneg %p57
      %p64 = scmp.eq.s32.totalorder %s22, 1
      %p65 = por %p63, %p64
      %p66 = scmp.ne.s32.totalorder %s58, %s61
      %p67 = scmp.eq.s32.totalorder %s22, 0
      %p68 = por %p66, %p67
      %p69 = scmp.ne.s32.totalorder %s58, %s61
      %p70 = scmp.eq.s32.totalorder %s27, 1
      %p71 = por %p69, %p70
      %p72 = scmp.ne.s32.totalorder %s61, %s62
      %p73 = scmp.eq.s32.totalorder %s27, 0
      %p74 = por %p72, %p73
      %p75 = scmp.ne.s32.totalorder %s61, %s62
      %p76 = scmp.eq.s32.totalorder %s28, 1
      %p77 = por %p75, %p76
      %p79 = scmp.ne.s32.totalorder %s62, %s78
      %p80 = scmp.eq.s32.totalorder %s28, 0
      %p81 = por %p79, %p80
      %s82 = ssub.s32 %s22, %s29
      %p83 = scmp.eq.s32.totalorder %s82, 0
      %s85 = sadd.s32 %s84, 1
      %s86 = scalar_select %p83, %s84, %s85
      %p89 = pneg %p83
      %p90 = scmp.eq.s32.totalorder %s22, 1
      %p91 = por %p89, %p90
      %p92 = scmp.ne.s32.totalorder %s84, %s87
      %p93 = scmp.eq.s32.totalorder %s22, 0
      %p94 = por %p92, %p93
      %p95 = scmp.ne.s32.totalorder %s84, %s87
      %p96 = scmp.eq.s32.totalorder %s27, 1
      %p97 = por %p95, %p96
      %p98 = scmp.ne.s32.totalorder %s87, %s88
      %p99 = scmp.eq.s32.totalorder %s27, 0
      %p100 = por %p98, %p99
      %p101 = scmp.ne.s32.totalorder %s87, %s88
      %p102 = scmp.eq.s32.totalorder %s28, 1
      %p103 = por %p101, %p102
      %p105 = scmp.ne.s32.totalorder %s88, %s104
      %p106 = scmp.eq.s32.totalorder %s28, 0
      %p107 = por %p105, %p106
      %s109 = sadd.s32 %s108, 1
      %p112 = scmp.eq.s32.totalorder %s22, 1
      %p113 = scmp.ne.s32.totalorder %s108, %s110
      %p114 = scmp.eq.s32.totalorder %s22, 0
      %p115 = por %p113, %p114
      %p116 = scmp.ne.s32.totalorder %s108, %s110
      %p117 = scmp.eq.s32.totalorder %s27, 1
      %p118 = por %p116, %p117
      %p119 = scmp.ne.s32.totalorder %s110, %s111
      %p120 = scmp.eq.s32.totalorder %s27, 0
      %p121 = por %p119, %p120
      %p122 = scmp.ne.s32.totalorder %s110, %s111
      %p123 = scmp.eq.s32.totalorder %s28, 1
      %p124 = por %p122, %p123
      %p126 = scmp.ne.s32.totalorder %s111, %s125
      %p127 = scmp.eq.s32.totalorder %s28, 0
      %p128 = por %p126, %p127
      %s130 = sadd.s32 %s129, 1
      %p133 = scmp.eq.s32.totalorder %s22, 1
      %p134 = scmp.ne.s32.totalorder %s129, %s131
      %p135 = scmp.eq.s32.totalorder %s22, 0
      %p136 = por %p134, %p135
      %p137 = scmp.ne.s32.totalorder %s129, %s131
      %p138 = scmp.eq.s32.totalorder %s27, 1
      %p139 = por %p137, %p138
      %p140 = scmp.ne.s32.totalorder %s131, %s132
      %p141 = scmp.eq.s32.totalorder %s27, 0
      %p142 = por %p140, %p141
      %p143 = scmp.ne.s32.totalorder %s131, %s132
      %p144 = scmp.eq.s32.totalorder %s28, 1
      %p145 = por %p143, %p144
      %p147 = scmp.ne.s32.totalorder %s132, %s146
      %p148 = scmp.eq.s32.totalorder %s28, 0
      %p149 = por %p147, %p148
      %s151 = sadd.s32 %s150, 1
      %p154 = scmp.eq.s32.totalorder %s22, 1
      %p155 = scmp.ne.s32.totalorder %s150, %s152
      %p156 = scmp.eq.s32.totalorder %s22, 0
      %p157 = por %p155, %p156
      %p158 = scmp.ne.s32.totalorder %s150, %s152
      %p159 = scmp.eq.s32.totalorder %s27, 1
      %p160 = por %p158, %p159
      %p161 = scmp.ne.s32.totalorder %s152, %s153
      %p162 = scmp.eq.s32.totalorder %s27, 0
      %p163 = por %p161, %p162
      %p164 = scmp.ne.s32.totalorder %s152, %s153
      %p165 = scmp.eq.s32.totalorder %s28, 1
      %p166 = por %p164, %p165
      %p168 = scmp.ne.s32.totalorder %s153, %s167
      %p169 = scmp.eq.s32.totalorder %s28, 0
      %p170 = por %p168, %p169
      %s172 = sadd.s32 %s171, 1
      %p175 = scmp.eq.s32.totalorder %s22, 1
      %p176 = scmp.ne.s32.totalorder %s171, %s173
      %p177 = scmp.eq.s32.totalorder %s22, 0
      %p178 = por %p176, %p177
      %p179 = scmp.ne.s32.totalorder %s171, %s173
      %p180 = scmp.eq.s32.totalorder %s27, 1
      %p181 = por %p179, %p180
      %p182 = scmp.ne.s32.totalorder %s173, %s174
      %p183 = scmp.eq.s32.totalorder %s27, 0
      %p184 = por %p182, %p183
      %p185 = scmp.ne.s32.totalorder %s173, %s174
      %p186 = scmp.eq.s32.totalorder %s28, 1
      %p187 = por %p185, %p186
      %p189 = scmp.ne.s32.totalorder %s174, %s188
      %p190 = scmp.eq.s32.totalorder %s28, 0
      %p191 = por %p189, %p190
      %s193 = sadd.s32 %s192, 1
      %p196 = scmp.eq.s32.totalorder %s22, 1
      %p197 = scmp.ne.s32.totalorder %s192, %s194
      %p198 = scmp.eq.s32.totalorder %s22, 0
      %p199 = por %p197, %p198
      %p200 = scmp.ne.s32.totalorder %s192, %s194
      %p201 = scmp.eq.s32.totalorder %s27, 1
      %p202 = por %p200, %p201
      %p203 = scmp.ne.s32.totalorder %s194, %s195
      %p204 = scmp.eq.s32.totalorder %s27, 0
      %p205 = por %p203, %p204
      %p206 = scmp.ne.s32.totalorder %s194, %s195
      %p207 = scmp.eq.s32.totalorder %s28, 1
      %p208 = por %p206, %p207
      %p210 = scmp.ne.s32.totalorder %s195, %s209
      %p211 = scmp.eq.s32.totalorder %s28, 0
      %p212 = por %p210, %p211
      %s213 = ssub.s32 %s22, %s29
      %p214 = scmp.eq.s32.totalorder %s213, 0
      %s216 = sadd.s32 %s215, 1
      %s217 = scalar_select %p214, %s215, %s216
      %p220 = pneg %p214
      %p221 = scmp.eq.s32.totalorder %s22, 1
      %p222 = por %p220, %p221
      %p223 = scmp.ne.s32.totalorder %s215, %s218
      %p224 = scmp.eq.s32.totalorder %s22, 0
      %p225 = por %p223, %p224
      %p226 = scmp.ne.s32.totalorder %s215, %s218
      %p227 = scmp.eq.s32.totalorder %s27, 1
      %p228 = por %p226, %p227
      %p229 = scmp.ne.s32.totalorder %s218, %s219
      %p230 = scmp.eq.s32.totalorder %s27, 0
      %p231 = por %p229, %p230
      %p232 = scmp.ne.s32.totalorder %s218, %s219
      %p233 = scmp.eq.s32.totalorder %s28, 1
      %p234 = por %p232, %p233
      %p236 = scmp.ne.s32.totalorder %s219, %s235
      %p237 = scmp.eq.s32.totalorder %s28, 0
      %p238 = por %p236, %p237
      %s239 = ssub.s32 %s22, %s29
      %p240 = scmp.eq.s32.totalorder %s239, 0
      %s242 = sadd.s32 %s241, 1
      %s243 = scalar_select %p240, %s241, %s242
      %p246 = pneg %p240
      %p247 = scmp.eq.s32.totalorder %s22, 1
      %p248 = por %p246, %p247
      %p249 = scmp.ne.s32.totalorder %s241, %s244
      %p250 = scmp.eq.s32.totalorder %s22, 0
      %p251 = por %p249, %p250
      %p252 = scmp.ne.s32.totalorder %s241, %s244
      %p253 = scmp.eq.s32.totalorder %s27, 1
      %p254 = por %p252, %p253
      %p255 = scmp.ne.s32.totalorder %s244, %s245
      %p256 = scmp.eq.s32.totalorder %s27, 0
      %p257 = por %p255, %p256
      %p258 = scmp.ne.s32.totalorder %s244, %s245
      %p259 = scmp.eq.s32.totalorder %s28, 1
      %p260 = por %p258, %p259
      %p262 = scmp.ne.s32.totalorder %s245, %s261
      %p263 = scmp.eq.s32.totalorder %s28, 0
      %p264 = por %p262, %p263
      %p265 = scmp.le.s32.totalorder 1, %s22
      %p266 = scmp.lt.s32.totalorder %s22, 3
      %p267 = pnand %p265, %p266
      %p268 = pneg %p267
      // Predicated region
      $region9: #{tpu_custom_call.1} parent=5 // pred_check
        _
      $region10: #{tpu_custom_call.1} parent=5 // pred_check_branch
        %270 = sbr.rel (%p267) target = $region12
      $region11: #{tpu_custom_call.1} parent=5 // pred_region
        %s271 = ssub.s32 %s22, 1
        // Predicated region
        $region13: #{tpu_custom_call.1} parent=11 // pred_check
          %p272 = pneg %p121
        $region14: #{tpu_custom_call.1} parent=11 // pred_check_branch
          %274 = sbr.rel (%p272) target = $region16
        $region15: #{tpu_custom_call.1} parent=11 // pred_region
          _
        $region16: #{tpu_custom_call.1} parent=11 // pred_fallthru
          _
        // Predicated region
        $region17: #{tpu_custom_call.1} parent=11 // pred_check
          %p275 = pneg %p142
        $region18: #{tpu_custom_call.1} parent=11 // pred_check_branch
          %277 = sbr.rel (%p275) target = $region20
        $region19: #{tpu_custom_call.1} parent=11 // pred_region
          _
        $region20: #{tpu_custom_call.1} parent=11 // pred_fallthru
          _
        // Predicated region
        $region21: #{tpu_custom_call.1} parent=11 // pred_check
          %p278 = pneg %p163
        $region22: #{tpu_custom_call.1} parent=11 // pred_check_branch
          %280 = sbr.rel (%p278) target = $region24
        $region23: #{tpu_custom_call.1} parent=11 // pred_region
          _
        $region24: #{tpu_custom_call.1} parent=11 // pred_fallthru
          _
        // Predicated region
        $region25: #{tpu_custom_call.1} parent=11 // pred_check
          %p281 = pneg %p184
        $region26: #{tpu_custom_call.1} parent=11 // pred_check_branch
          %283 = sbr.rel (%p281) target = $region28
        $region27: #{tpu_custom_call.1} parent=11 // pred_region
          _
        $region28: #{tpu_custom_call.1} parent=11 // pred_fallthru
          _
        // Predicated region
        $region29: #{tpu_custom_call.1} parent=11 // pred_check
          %p284 = pneg %p205
        $region30: #{tpu_custom_call.1} parent=11 // pred_check_branch
          %286 = sbr.rel (%p284) target = $region32
        $region31: #{tpu_custom_call.1} parent=11 // pred_region
          _
        $region32: #{tpu_custom_call.1} parent=11 // pred_fallthru
          _
      $region12: #{tpu_custom_call.1} parent=5 // pred_fallthru
        _
      %p287 = scmp.lt.s32.totalorder %s22, 2
      // Predicated region
      $region33: #{tpu_custom_call.1} parent=5 // pred_check
        %p288 = pneg %p287
      $region34: #{tpu_custom_call.1} parent=5 // pred_check_branch
        %290 = sbr.rel (%p288) target = $region36
      $region35: #{tpu_custom_call.1} parent=5 // pred_region
        // Predicated region
        $region37: #{tpu_custom_call.1} parent=35 // pred_check
          %p291 = pneg %p42
        $region38: #{tpu_custom_call.1} parent=35 // pred_check_branch
          %293 = sbr.rel (%p291) target = $region40
        $region39: #{tpu_custom_call.1} parent=35 // pred_region
          %p294 = scmp.lt.s32.totalorder %s22, 1
          %s295 = scalar_select %p294, %s22, 1
          %s296 = smul.addr %s295, 2
          %s297 = smul.addr %s296, 8
          %s298 = scalar_lea.vmem %s0, %s297
        $region40: #{tpu_custom_call.1} parent=35 // pred_fallthru
          _
        // Predicated region
        $region41: #{tpu_custom_call.1} parent=35 // pred_check
          %p299 = pneg %p68
        $region42: #{tpu_custom_call.1} parent=35 // pred_check_branch
          %301 = sbr.rel (%p299) target = $region44
        $region43: #{tpu_custom_call.1} parent=35 // pred_region
          %p302 = scmp.lt.s32.totalorder %s22, 1
          %s303 = scalar_select %p302, %s22, 1
          %s304 = smul.addr %s303, 2
          %s305 = smul.addr %s304, 8
          %s306 = scalar_lea.vmem %s1, %s305
        $region44: #{tpu_custom_call.1} parent=35 // pred_fallthru
          _
        // Predicated region
        $region45: #{tpu_custom_call.1} parent=35 // pred_check
          %p307 = pneg %p94
        $region46: #{tpu_custom_call.1} parent=35 // pred_check_branch
          %309 = sbr.rel (%p307) target = $region48
        $region47: #{tpu_custom_call.1} parent=35 // pred_region
          %p310 = scmp.lt.s32.totalorder %s22, 1
          %s311 = scalar_select %p310, %s22, 1
          %s312 = smul.addr %s311, 2
          %s313 = smul.addr %s312, 8
          %s314 = scalar_lea.vmem %s2, %s313
        $region48: #{tpu_custom_call.1} parent=35 // pred_fallthru
          _
      $region36: #{tpu_custom_call.1} parent=5 // pred_fallthru
        _
      %p315 = scmp.le.s32.totalorder 1, %s22
      %p316 = scmp.lt.s32.totalorder %s22, 3
      %p317 = pnand %p315, %p316
      %p318 = pneg %p317
      // Predicated region
      $region49: #{tpu_custom_call.1} parent=5 // pred_check
        _
      $region50: #{tpu_custom_call.1} parent=5 // pred_check_branch
        %320 = sbr.rel (%p317) target = $region52
      $region51: #{tpu_custom_call.1} parent=5 // pred_region
        %s321 = ssub.s32 %s22, 1
        %p322 = scmp.lt.s32.totalorder %s27, 1
        %s323 = scalar_select %p322, %s27, 1
        %s324 = smul.addr %s323, 2
        %s325 = smul.addr %s324, 8
        %s326 = scalar_lea.vmem %s0, %s325
        %p327 = pneg %p48
        %p328 = pneg %p45
        %p329 = scmp.lt.s32.totalorder %s27, 1
        %s330 = scalar_select %p329, %s27, 1
        %s331 = smul.addr %s330, 2
        %s332 = smul.addr %s331, 8
        %s333 = scalar_lea.vmem %s1, %s332
        %p334 = pneg %p74
        %p335 = pneg %p71
        %p336 = scmp.lt.s32.totalorder %s27, 1
        %s337 = scalar_select %p336, %s27, 1
        %s338 = smul.addr %s337, 2
        %s339 = smul.addr %s338, 8
        %s340 = scalar_lea.vmem %s2, %s339
        %p341 = pneg %p100
        %p342 = pneg %p97
        %p343 = pneg %p121
        %p344 = pneg %p118
        %p345 = pneg %p142
        %p346 = pneg %p139
        %p347 = pneg %p163
        %p348 = pneg %p160
        %p349 = pneg %p184
        %p350 = pneg %p181
        %p351 = pneg %p205
        %p352 = pneg %p202
        %p353 = pneg %p231
        %p354 = pneg %p228
        %s355 = sand.u32 %s218, 1
        %s356 = scalar_lea.sflag [#allocation3], %s355
        %s357 = sand.u32 %s218, 1
        %s358 = smul.addr %s357, 16
        %s359 = scalar_lea.vmem [#allocation2], %s358
        %p360 = pneg %p257
        %p361 = pneg %p254
        %s362 = sand.u32 %s244, 1
        %s363 = scalar_lea.sflag [#allocation5], %s362
        %s364 = sand.u32 %s244, 1
        %s365 = smul.addr %s364, 16
        %s366 = scalar_lea.vmem [#allocation4], %s365
        %p367 = scmp.lt.s32.totalorder %s27, 1
        %s368 = scalar_select %p367, %s27, 1
        %s369 = smul.addr %s368, 2
        %s370 = smul.addr %s369, 8
        %s371 = scalar_lea.vmem %s0, %s370
        %p372 = scmp.lt.s32.totalorder %s27, 1
        %s373 = scalar_select %p372, %s27, 1
        %s374 = smul.addr %s373, 2
        %s375 = smul.addr %s374, 8
        %s376 = scalar_lea.vmem %s1, %s375
        %p377 = scmp.lt.s32.totalorder %s27, 1
        %s378 = scalar_select %p377, %s27, 1
        %s379 = smul.addr %s378, 2
        %s380 = smul.addr %s379, 8
        %s381 = scalar_lea.vmem %s2, %s380
        %v382 = vld [vmem:[%s3] sm:$0xff]
        %v383 = vld [vmem:[%s3 + $0x8] sm:$0xff]
        %v384 = vld [vmem:[%s3 + $0x10] sm:$0xff]
        %v385 = vld [vmem:[%s3 + $0x18] sm:$0xff]
        %v386 = vld [vmem:[%s4] sm:$0xff]
        %v387 = vld [vmem:[%s4 + $0x8] sm:$0xff]
        %v388 = vld [vmem:[%s4 + $0x10] sm:$0xff]
        %v389 = vld [vmem:[%s4 + $0x18] sm:$0xff]
        %v390 = vld [vmem:[%s5] sm:$0x7f]
        %v391 = vld [vmem:[%s5 + $0x8] sm:$0x7f]
        %v392 = vld [vmem:[%s5 + $0x10] sm:$0x7f]
        %v393 = vld [vmem:[%s5 + $0x18] sm:$0x7f]
        %v394 = vld [vmem:[%s5 + $0x20] sm:$0x7f]
        %v395 = vld [vmem:[%s5 + $0x28] sm:$0x7f]
        %v396 = vld [vmem:[%s5 + $0x30] sm:$0x7f]
        %v397 = vld [vmem:[%s5 + $0x38] sm:$0x7f]
        %v398 = vld [vmem:[%s5 + $0x40] sm:$0x7f]
        %v399 = vld [vmem:[%s5 + $0x48] sm:$0x7f]
        %v400 = vld [vmem:[%s5 + $0x50] sm:$0x7f]
        %v401 = vld [vmem:[%s5 + $0x58] sm:$0x7f]
        %v402 = vld [vmem:[%s5 + $0x60] sm:$0x7f]
        %v403 = vld [vmem:[%s5 + $0x68] sm:$0x7f]
        %v404 = vld [vmem:[%s5 + $0x70] sm:$0x7f]
        %v405 = vld [vmem:[%s5 + $0x78] sm:$0x7f]
        %v406 = vld [vmem:[%s5 + $0x80] sm:$0x7f]
        %v407 = vld [vmem:[%s5 + $0x88] sm:$0x7f]
        %v408 = vld [vmem:[%s5 + $0x90] sm:$0x7f]
        %v409 = vld [vmem:[%s5 + $0x98] sm:$0x7f]
        %v410 = vld [vmem:[%s5 + $0xa0] sm:$0x7f]
        %v411 = vld [vmem:[%s5 + $0xa8] sm:$0x7f]
        %v412 = vld [vmem:[%s5 + $0xb0] sm:$0x7f]
        %v413 = vld [vmem:[%s5 + $0xb8] sm:$0x7f]
        %v414 = vld [vmem:[%s5 + $0xc0] sm:$0x7f]
        %v415 = vld [vmem:[%s5 + $0xc8] sm:$0x7f]
        %v416 = vld [vmem:[%s5 + $0xd0] sm:$0x7f]
        %v417 = vld [vmem:[%s5 + $0xd8] sm:$0x7f]
        %v418 = vld [vmem:[%s5 + $0xe0] sm:$0x7f]
        %v419 = vld [vmem:[%s5 + $0xe8] sm:$0x7f]
        %v420 = vld [vmem:[%s5 + $0xf0] sm:$0x7f]
        %v421 = vld [vmem:[%s5 + $0xf8] sm:$0x7f]
        %v422 = vld [vmem:[%s6] sm:$0x1]
        %v423 = vld [vmem:[%s7] sm:$0x1]
        %v424 = vld [vmem:[%s371] sm:$0xff]
        %v425 = vld [vmem:[%s371 + $0x8] sm:$0xff]
        %v426 = vld [vmem:[%s376] sm:$0xff]
        %v427 = vld [vmem:[%s376 + $0x8] sm:$0xff]
        %v428 = vld [vmem:[%s381] sm:$0xff]
        %v429 = vld [vmem:[%s381 + $0x8] sm:$0xff]
        %v430 = vsub.f32 1.0, %v428
        %v431 = vsub.f32 1.0, %v429
        %vm432 = vcmask 261120
        %v433 = vsel %vm432, %v424, 0.0
        %434 = vadd.xlane.f32.xlu0 %v433
        %v435 = vpop.xlane.xlu0 %434
        %v436 = vsel %vm432, %v425, 0.0
        %437 = vadd.xlane.f32.xlu0 %v436
        %v438 = vpop.xlane.xlu0 %437
        %v439 = vrcp.pop 32.0
        %v440 = vmul.f32 %v435, %v439
        %v441 = vmul.f32 %v438, %v439
        %v442 = vsub.f32 %v424, %v440
        %v443 = vsub.f32 %v425, %v441
        %v444 = vmul.f32 %v442, %v442
        %v445 = vmul.f32 %v443, %v443
        %v446 = vsel %vm432, %v444, 0.0
        %447 = vadd.xlane.f32.xlu0 %v446
        %v448 = vpop.xlane.xlu0 %447
        %v449 = vsel %vm432, %v445, 0.0
        %450 = vadd.xlane.f32.xlu0 %v449
        %v451 = vpop.xlane.xlu0 %450
        %v452 = vmul.f32 %v448, %v439
        %v453 = vmul.f32 %v451, %v439
        %v454 = vadd.f32 %v452, 1e-05
        %v455 = vadd.f32 %v453, 1e-05
        %v456 = vrsqrt.pop %v454
        %v457 = vrsqrt.pop %v455
        %v458 = vmul.f32 %v442, %v456
        %v459 = vmul.f32 %v443, %v457
        %v461 = vlaneseq
        %v462 = vshrl.u32 %v461, 7
        %v463 = vsub.s32 0, %v462
        %v464 = vrot.slane %v422, %v463
        %v466 = vmul.f32 %v458, %v464
        %v467 = vmul.f32 %v459, %v464
        %v469 = vlaneseq
        %v470 = vshrl.u32 %v469, 7
        %v471 = vsub.s32 0, %v470
        %v472 = vrot.slane %v423, %v471
        %v474 = vadd.f32 %v466, %v472
        %v475 = vadd.f32 %v467, %v472
        %v476 = vlaneseq
        %v477 = vshrl.u32 %v476, 7
        %v478 = vsub.s32 0, %v477
        %v479 = vrot.slane %v430, %v478
        %481 = vbcast.lane.b32.xlu0 %v479, 256
        %v482 = vpop.permute.xlu0 %481
        %v483 = vlaneseq
        %v484 = vshrl.u32 %v483, 7
        %v485 = vsub.s32 1, %v484
        %v486 = vrot.slane %v430, %v485
        %488 = vbcast.lane.b32.xlu0 %v486, 256
        %v489 = vpop.permute.xlu0 %488
        %v490 = vlaneseq
        %v491 = vshrl.u32 %v490, 7
        %v492 = vsub.s32 2, %v491
        %v493 = vrot.slane %v430, %v492
        %495 = vbcast.lane.b32.xlu0 %v493, 256
        %v496 = vpop.permute.xlu0 %495
        %v497 = vlaneseq
        %v498 = vshrl.u32 %v497, 7
        %v499 = vsub.s32 3, %v498
        %v500 = vrot.slane %v430, %v499
        %502 = vbcast.lane.b32.xlu0 %v500, 256
        %v503 = vpop.permute.xlu0 %502
        %v504 = vlaneseq
        %v505 = vshrl.u32 %v504, 7
        %v506 = vsub.s32 4, %v505
        %v507 = vrot.slane %v430, %v506
        %509 = vbcast.lane.b32.xlu0 %v507, 256
        %v510 = vpop.permute.xlu0 %509
        %v511 = vlaneseq
        %v512 = vshrl.u32 %v511, 7
        %v513 = vsub.s32 5, %v512
        %v514 = vrot.slane %v430, %v513
        %516 = vbcast.lane.b32.xlu0 %v514, 256
        %v517 = vpop.permute.xlu0 %516
        %v518 = vlaneseq
        %v519 = vshrl.u32 %v518, 7
        %v520 = vsub.s32 6, %v519
        %v521 = vrot.slane %v430, %v520
        %523 = vbcast.lane.b32.xlu0 %v521, 256
        %v524 = vpop.permute.xlu0 %523
        %v525 = vlaneseq
        %v526 = vshrl.u32 %v525, 7
        %v527 = vsub.s32 7, %v526
        %v528 = vrot.slane %v430, %v527
        %530 = vbcast.lane.b32.xlu0 %v528, 256
        %v531 = vpop.permute.xlu0 %530
        %v532 = vlaneseq
        %v533 = vshrl.u32 %v532, 7
        %v534 = vsub.s32 0, %v533
        %v535 = vrot.slane %v431, %v534
        %537 = vbcast.lane.b32.xlu0 %v535, 256
        %v538 = vpop.permute.xlu0 %537
        %v539 = vlaneseq
        %v540 = vshrl.u32 %v539, 7
        %v541 = vsub.s32 1, %v540
        %v542 = vrot.slane %v431, %v541
        %544 = vbcast.lane.b32.xlu0 %v542, 256
        %v545 = vpop.permute.xlu0 %544
        %v546 = vlaneseq
        %v547 = vshrl.u32 %v546, 7
        %v548 = vsub.s32 2, %v547
        %v549 = vrot.slane %v431, %v548
        %551 = vbcast.lane.b32.xlu0 %v549, 256
        %v552 = vpop.permute.xlu0 %551
        %v553 = vlaneseq
        %v554 = vshrl.u32 %v553, 7
        %v555 = vsub.s32 3, %v554
        %v556 = vrot.slane %v431, %v555
        %558 = vbcast.lane.b32.xlu0 %v556, 256
        %v559 = vpop.permute.xlu0 %558
        %v560 = vlaneseq
        %v561 = vshrl.u32 %v560, 7
        %v562 = vsub.s32 4, %v561
        %v563 = vrot.slane %v431, %v562
        %565 = vbcast.lane.b32.xlu0 %v563, 256
        %v566 = vpop.permute.xlu0 %565
        %v567 = vlaneseq
        %v568 = vshrl.u32 %v567, 7
        %v569 = vsub.s32 5, %v568
        %v570 = vrot.slane %v431, %v569
        %572 = vbcast.lane.b32.xlu0 %v570, 256
        %v573 = vpop.permute.xlu0 %572
        %v574 = vlaneseq
        %v575 = vshrl.u32 %v574, 7
        %v576 = vsub.s32 6, %v575
        %v577 = vrot.slane %v431, %v576
        %579 = vbcast.lane.b32.xlu0 %v577, 256
        %v580 = vpop.permute.xlu0 %579
        %v581 = vlaneseq
        %v582 = vshrl.u32 %v581, 7
        %v583 = vsub.s32 7, %v582
        %v584 = vrot.slane %v431, %v583
        %586 = vbcast.lane.b32.xlu0 %v584, 256
        %v587 = vpop.permute.xlu0 %586
        %v588 = vmul.f32 %v482, %v390
        %v589 = vmul.f32 %v489, %v391
        %v590 = vmul.f32 %v496, %v392
        %v591 = vmul.f32 %v503, %v393
        %v592 = vmul.f32 %v510, %v394
        %v593 = vmul.f32 %v517, %v395
        %v594 = vmul.f32 %v524, %v396
        %v595 = vmul.f32 %v531, %v397
        %v596 = vmul.f32 %v538, %v398
        %v597 = vmul.f32 %v545, %v399
        %v598 = vmul.f32 %v552, %v400
        %v599 = vmul.f32 %v559, %v401
        %v600 = vmul.f32 %v566, %v402
        %v601 = vmul.f32 %v573, %v403
        %v602 = vmul.f32 %v580, %v404
        %v603 = vmul.f32 %v587, %v405
        %v604 = vmul.f32 %v482, %v406
        %v605 = vmul.f32 %v489, %v407
        %v606 = vmul.f32 %v496, %v408
        %v607 = vmul.f32 %v503, %v409
        %v608 = vmul.f32 %v510, %v410
        %v609 = vmul.f32 %v517, %v411
        %v610 = vmul.f32 %v524, %v412
        %v611 = vmul.f32 %v531, %v413
        %v612 = vmul.f32 %v538, %v414
        %v613 = vmul.f32 %v545, %v415
        %v614 = vmul.f32 %v552, %v416
        %v615 = vmul.f32 %v559, %v417
        %v616 = vmul.f32 %v566, %v418
        %v617 = vmul.f32 %v573, %v419
        %v618 = vmul.f32 %v580, %v420
        %v619 = vmul.f32 %v587, %v421
        %vm620 = vcmask 129024
        %v621 = vsel %vm620, %v588, 0.0
        %v622 = vrot.slane %v621, 4
        %v623 = vadd.f32 %v621, %v622
        %v624 = vrot.slane %v623, 2
        %v625 = vadd.f32 %v623, %v624
        %v626 = vrot.slane %v625, 1
        %v627 = vadd.f32 %v625, %v626
        %v628 = vsel %vm620, %v589, 0.0
        %v629 = vrot.slane %v628, 4
        %v630 = vadd.f32 %v628, %v629
        %v631 = vrot.slane %v630, 2
        %v632 = vadd.f32 %v630, %v631
        %v633 = vrot.slane %v632, 1
        %v634 = vadd.f32 %v632, %v633
        %v635 = vsel %vm620, %v590, 0.0
        %v636 = vrot.slane %v635, 4
        %v637 = vadd.f32 %v635, %v636
        %v638 = vrot.slane %v637, 2
        %v639 = vadd.f32 %v637, %v638
        %v640 = vrot.slane %v639, 1
        %v641 = vadd.f32 %v639, %v640
        %v642 = vsel %vm620, %v591, 0.0
        %v643 = vrot.slane %v642, 4
        %v644 = vadd.f32 %v642, %v643
        %v645 = vrot.slane %v644, 2
        %v646 = vadd.f32 %v644, %v645
        %v647 = vrot.slane %v646, 1
        %v648 = vadd.f32 %v646, %v647
        %v649 = vsel %vm620, %v592, 0.0
        %v650 = vrot.slane %v649, 4
        %v651 = vadd.f32 %v649, %v650
        %v652 = vrot.slane %v651, 2
        %v653 = vadd.f32 %v651, %v652
        %v654 = vrot.slane %v653, 1
        %v655 = vadd.f32 %v653, %v654
        %v656 = vsel %vm620, %v593, 0.0
        %v657 = vrot.slane %v656, 4
        %v658 = vadd.f32 %v656, %v657
        %v659 = vrot.slane %v658, 2
        %v660 = vadd.f32 %v658, %v659
        %v661 = vrot.slane %v660, 1
        %v662 = vadd.f32 %v660, %v661
        %v663 = vsel %vm620, %v594, 0.0
        %v664 = vrot.slane %v663, 4
        %v665 = vadd.f32 %v663, %v664
        %v666 = vrot.slane %v665, 2
        %v667 = vadd.f32 %v665, %v666
        %v668 = vrot.slane %v667, 1
        %v669 = vadd.f32 %v667, %v668
        %v670 = vsel %vm620, %v595, 0.0
        %v671 = vrot.slane %v670, 4
        %v672 = vadd.f32 %v670, %v671
        %v673 = vrot.slane %v672, 2
        %v674 = vadd.f32 %v672, %v673
        %v675 = vrot.slane %v674, 1
        %v676 = vadd.f32 %v674, %v675
        %v677 = vsel %vm620, %v596, 0.0
        %v678 = vrot.slane %v677, 4
        %v679 = vadd.f32 %v677, %v678
        %v680 = vrot.slane %v679, 2
        %v681 = vadd.f32 %v679, %v680
        %v682 = vrot.slane %v681, 1
        %v683 = vadd.f32 %v681, %v682
        %v684 = vsel %vm620, %v597, 0.0
        %v685 = vrot.slane %v684, 4
        %v686 = vadd.f32 %v684, %v685
        %v687 = vrot.slane %v686, 2
        %v688 = vadd.f32 %v686, %v687
        %v689 = vrot.slane %v688, 1
        %v690 = vadd.f32 %v688, %v689
        %v691 = vsel %vm620, %v598, 0.0
        %v692 = vrot.slane %v691, 4
        %v693 = vadd.f32 %v691, %v692
        %v694 = vrot.slane %v693, 2
        %v695 = vadd.f32 %v693, %v694
        %v696 = vrot.slane %v695, 1
        %v697 = vadd.f32 %v695, %v696
        %v698 = vsel %vm620, %v599, 0.0
        %v699 = vrot.slane %v698, 4
        %v700 = vadd.f32 %v698, %v699
        %v701 = vrot.slane %v700, 2
        %v702 = vadd.f32 %v700, %v701
        %v703 = vrot.slane %v702, 1
        %v704 = vadd.f32 %v702, %v703
        %v705 = vsel %vm620, %v600, 0.0
        %v706 = vrot.slane %v705, 4
        %v707 = vadd.f32 %v705, %v706
        %v708 = vrot.slane %v707, 2
        %v709 = vadd.f32 %v707, %v708
        %v710 = vrot.slane %v709, 1
        %v711 = vadd.f32 %v709, %v710
        %v712 = vsel %vm620, %v601, 0.0
        %v713 = vrot.slane %v712, 4
        %v714 = vadd.f32 %v712, %v713
        %v715 = vrot.slane %v714, 2
        %v716 = vadd.f32 %v714, %v715
        %v717 = vrot.slane %v716, 1
        %v718 = vadd.f32 %v716, %v717
        %v719 = vsel %vm620, %v602, 0.0
        %v720 = vrot.slane %v719, 4
        %v721 = vadd.f32 %v719, %v720
        %v722 = vrot.slane %v721, 2
        %v723 = vadd.f32 %v721, %v722
        %v724 = vrot.slane %v723, 1
        %v725 = vadd.f32 %v723, %v724
        %v726 = vsel %vm620, %v603, 0.0
        %v727 = vrot.slane %v726, 4
        %v728 = vadd.f32 %v726, %v727
        %v729 = vrot.slane %v728, 2
        %v730 = vadd.f32 %v728, %v729
        %v731 = vrot.slane %v730, 1
        %v732 = vadd.f32 %v730, %v731
        %v733 = vsel %vm620, %v604, 0.0
        %v734 = vrot.slane %v733, 4
        %v735 = vadd.f32 %v733, %v734
        %v736 = vrot.slane %v735, 2
        %v737 = vadd.f32 %v735, %v736
        %v738 = vrot.slane %v737, 1
        %v739 = vadd.f32 %v737, %v738
        %v740 = vsel %vm620, %v605, 0.0
        %v741 = vrot.slane %v740, 4
        %v742 = vadd.f32 %v740, %v741
        %v743 = vrot.slane %v742, 2
        %v744 = vadd.f32 %v742, %v743
        %v745 = vrot.slane %v744, 1
        %v746 = vadd.f32 %v744, %v745
        %v747 = vsel %vm620, %v606, 0.0
        %v748 = vrot.slane %v747, 4
        %v749 = vadd.f32 %v747, %v748
        %v750 = vrot.slane %v749, 2
        %v751 = vadd.f32 %v749, %v750
        %v752 = vrot.slane %v751, 1
        %v753 = vadd.f32 %v751, %v752
        %v754 = vsel %vm620, %v607, 0.0
        %v755 = vrot.slane %v754, 4
        %v756 = vadd.f32 %v754, %v755
        %v757 = vrot.slane %v756, 2
        %v758 = vadd.f32 %v756, %v757
        %v759 = vrot.slane %v758, 1
        %v760 = vadd.f32 %v758, %v759
        %v761 = vsel %vm620, %v608, 0.0
        %v762 = vrot.slane %v761, 4
        %v763 = vadd.f32 %v761, %v762
        %v764 = vrot.slane %v763, 2
        %v765 = vadd.f32 %v763, %v764
        %v766 = vrot.slane %v765, 1
        %v767 = vadd.f32 %v765, %v766
        %v768 = vsel %vm620, %v609, 0.0
        %v769 = vrot.slane %v768, 4
        %v770 = vadd.f32 %v768, %v769
        %v771 = vrot.slane %v770, 2
        %v772 = vadd.f32 %v770, %v771
        %v773 = vrot.slane %v772, 1
        %v774 = vadd.f32 %v772, %v773
        %v775 = vsel %vm620, %v610, 0.0
        %v776 = vrot.slane %v775, 4
        %v777 = vadd.f32 %v775, %v776
        %v778 = vrot.slane %v777, 2
        %v779 = vadd.f32 %v777, %v778
        %v780 = vrot.slane %v779, 1
        %v781 = vadd.f32 %v779, %v780
        %v782 = vsel %vm620, %v611, 0.0
        %v783 = vrot.slane %v782, 4
        %v784 = vadd.f32 %v782, %v783
        %v785 = vrot.slane %v784, 2
        %v786 = vadd.f32 %v784, %v785
        %v787 = vrot.slane %v786, 1
        %v788 = vadd.f32 %v786, %v787
        %v789 = vsel %vm620, %v612, 0.0
        %v790 = vrot.slane %v789, 4
        %v791 = vadd.f32 %v789, %v790
        %v792 = vrot.slane %v791, 2
        %v793 = vadd.f32 %v791, %v792
        %v794 = vrot.slane %v793, 1
        %v795 = vadd.f32 %v793, %v794
        %v796 = vsel %vm620, %v613, 0.0
        %v797 = vrot.slane %v796, 4
        %v798 = vadd.f32 %v796, %v797
        %v799 = vrot.slane %v798, 2
        %v800 = vadd.f32 %v798, %v799
        %v801 = vrot.slane %v800, 1
        %v802 = vadd.f32 %v800, %v801
        %v803 = vsel %vm620, %v614, 0.0
        %v804 = vrot.slane %v803, 4
        %v805 = vadd.f32 %v803, %v804
        %v806 = vrot.slane %v805, 2
        %v807 = vadd.f32 %v805, %v806
        %v808 = vrot.slane %v807, 1
        %v809 = vadd.f32 %v807, %v808
        %v810 = vsel %vm620, %v615, 0.0
        %v811 = vrot.slane %v810, 4
        %v812 = vadd.f32 %v810, %v811
        %v813 = vrot.slane %v812, 2
        %v814 = vadd.f32 %v812, %v813
        %v815 = vrot.slane %v814, 1
        %v816 = vadd.f32 %v814, %v815
        %v817 = vsel %vm620, %v616, 0.0
        %v818 = vrot.slane %v817, 4
        %v819 = vadd.f32 %v817, %v818
        %v820 = vrot.slane %v819, 2
        %v821 = vadd.f32 %v819, %v820
        %v822 = vrot.slane %v821, 1
        %v823 = vadd.f32 %v821, %v822
        %v824 = vsel %vm620, %v617, 0.0
        %v825 = vrot.slane %v824, 4
        %v826 = vadd.f32 %v824, %v825
        %v827 = vrot.slane %v826, 2
        %v828 = vadd.f32 %v826, %v827
        %v829 = vrot.slane %v828, 1
        %v830 = vadd.f32 %v828, %v829
        %v831 = vsel %vm620, %v618, 0.0
        %v832 = vrot.slane %v831, 4
        %v833 = vadd.f32 %v831, %v832
        %v834 = vrot.slane %v833, 2
        %v835 = vadd.f32 %v833, %v834
        %v836 = vrot.slane %v835, 1
        %v837 = vadd.f32 %v835, %v836
        %v838 = vsel %vm620, %v619, 0.0
        %v839 = vrot.slane %v838, 4
        %v840 = vadd.f32 %v838, %v839
        %v841 = vrot.slane %v840, 2
        %v842 = vadd.f32 %v840, %v841
        %v843 = vrot.slane %v842, 1
        %v844 = vadd.f32 %v842, %v843
        %vm861 = vcmask 1041409
        %v862 = vsel %vm861, %v634, %v627
        %vm863 = vcmask 1042434
        %v864 = vsel %vm863, %v641, %v862
        %vm865 = vcmask 1043459
        %v866 = vsel %vm865, %v648, %v864
        %vm867 = vcmask 1044484
        %v868 = vsel %vm867, %v655, %v866
        %vm869 = vcmask 1045509
        %v870 = vsel %vm869, %v662, %v868
        %vm871 = vcmask 1046534
        %v872 = vsel %vm871, %v669, %v870
        %vm873 = vcmask 1047559
        %v874 = vsel %vm873, %v676, %v872
        %v875 = vsel %vm861, %v690, %v683
        %v876 = vsel %vm863, %v697, %v875
        %v877 = vsel %vm865, %v704, %v876
        %v878 = vsel %vm867, %v711, %v877
        %v879 = vsel %vm869, %v718, %v878
        %v880 = vsel %vm871, %v725, %v879
        %v881 = vsel %vm873, %v732, %v880
        %v884 = vadd.f32 %v474, %v874
        %v885 = vadd.f32 %v475, %v881
        %v902 = vsel %vm861, %v746, %v739
        %v903 = vsel %vm863, %v753, %v902
        %v904 = vsel %vm865, %v760, %v903
        %v905 = vsel %vm867, %v767, %v904
        %v906 = vsel %vm869, %v774, %v905
        %v907 = vsel %vm871, %v781, %v906
        %v908 = vsel %vm873, %v788, %v907
        %v909 = vsel %vm861, %v802, %v795
        %v910 = vsel %vm863, %v809, %v909
        %v911 = vsel %vm865, %v816, %v910
        %v912 = vsel %vm867, %v823, %v911
        %v913 = vsel %vm869, %v830, %v912
        %v914 = vsel %vm871, %v837, %v913
        %v915 = vsel %vm873, %v844, %v914
        %916 = vrot.lane.b32.xlu0 %v908, 16
        %v917 = vpop.permute.xlu0 %916
        %918 = vrot.lane.b32.xlu0 %v915, 16
        %v919 = vpop.permute.xlu0 %918
        %v922 = vadd.f32 %v474, %v917
        %v923 = vadd.f32 %v475, %v919
        %926 = vrot.lane.b32.xlu0 %v922, 112
        %v927 = vpop.permute.xlu0 %926
        %928 = vrot.lane.b32.xlu0 %v923, 112
        %v929 = vpop.permute.xlu0 %928
        %933 = vset.pattern.permute.xlu0 0
        %934 = vperm.xlu0 %933, %v386
        %v935 = vpop.permute.xlu0 %934
        %938 = vset.pattern.permute.xlu0 0
        %939 = vperm.xlu0 %938, %v387
        %v940 = vpop.permute.xlu0 %939
        %943 = vset.pattern.permute.xlu0 0
        %944 = vperm.xlu0 %943, %v388
        %v945 = vpop.permute.xlu0 %944
        %948 = vset.pattern.permute.xlu0 0
        %949 = vperm.xlu0 %948, %v389
        %v950 = vpop.permute.xlu0 %949
        %vm952 = vcmask 130048
        %v954 = vsel %vm952, %v382, 0
        %v957 = vsel %vm952, %v383, 0
        %959 = vmatprep.subr.mxu0 0.0
        %960 = vmatpush1.msra.mxu0 %v884
        %961 = vmatprep.subr.mxu0 0.0
        %962 = vmatpush1.msra.mxu0 %v885
        %963 = vmatprep.subr.mxu0 0.0
        %964 = vmatpush1.msra.mxu0 0.0
        %965 = vmatprep.subr.mxu0 0.0
        %966 = vmatpush1.msra.mxu0 0.0
        %967 = vmatprep.subr.mxu0 0.0
        %968 = vmatpush1.msra.mxu0 0.0
        %969 = vmatprep.subr.mxu0 0.0
        %970 = vmatpush1.msra.mxu0 0.0
        %971 = vmatprep.subr.mxu0 0.0
        %972 = vmatpush1.msra.mxu0 0.0
        %973 = vmatprep.subr.mxu0 0.0
        %974 = vmatpush1.msra.mxu0 0.0
        %975 = vmatprep.subr.mxu0 0.0
        %976 = vmatpush1.msra.mxu0 0.0
        %977 = vmatprep.subr.mxu0 0.0
        %978 = vmatpush1.msra.mxu0 0.0
        %979 = vmatprep.subr.mxu0 0.0
        %980 = vmatpush1.msra.mxu0 0.0
        %981 = vmatprep.subr.mxu0 0.0
        %982 = vmatpush1.msra.mxu0 0.0
        %983 = vmatprep.subr.mxu0 0.0
        %984 = vmatpush1.msra.mxu0 0.0
        %985 = vmatprep.subr.mxu0 0.0
        %986 = vmatpush1.msra.mxu0 0.0
        %987 = vmatprep.subr.mxu0 0.0
        %988 = vmatpush1.msra.mxu0 0.0
        %989 = vmatprep.subr.mxu0 0.0
        %990 = vmatpush1.msra.mxu0 0.0
        %991 = vmatprep.subr.mxu0 0.0
        %992 = vmatpush1.msra.mxu0 0.0
        %993 = vmatprep.subr.mxu0 0.0
        %994 = vmatpush1.msra.mxu0 0.0
        %995 = vmatprep.subr.mxu0 0.0
        %996 = vmatpush1.msra.mxu0 0.0
        %997 = vmatprep.subr.mxu0 0.0
        %998 = vmatpush1.msra.mxu0 0.0
        %999 = vmatprep.subr.mxu0 0.0
        %1000 = vmatpush1.msra.mxu0 0.0
        %1001 = vmatprep.subr.mxu0 0.0
        %1002 = vmatpush1.msra.mxu0 0.0
        %1003 = vmatprep.subr.mxu0 0.0
        %1004 = vmatpush1.msra.mxu0 0.0
        %1005 = vmatprep.subr.mxu0 0.0
        %1006 = vmatpush1.msra.mxu0 0.0
        %1007 = vmatprep.subr.mxu0 0.0
        %1008 = vmatpush1.msra.mxu0 0.0
        %1009 = vmatprep.subr.mxu0 0.0
        %1010 = vmatpush1.msra.mxu0 0.0
        %1011 = vmatprep.subr.mxu0 0.0
        %1012 = vmatpush1.msra.mxu0 0.0
        %1013 = vmatprep.subr.mxu0 0.0
        %1014 = vmatpush1.msra.mxu0 0.0
        %1015 = vmatprep.subr.mxu0 0.0
        %1016 = vmatpush1.msra.mxu0 0.0
        %1017 = vmatprep.subr.mxu0 0.0
        %1018 = vmatpush1.msra.mxu0 0.0
        %1019 = vmatprep.subr.mxu0 0.0
        %1020 = vmatpush1.msra.mxu0 0.0
        %1021 = vmatprep.subr.mxu0 0.0
        %1022 = vmatpush1.msra.mxu0 0.0
        %1023 = vmatprep.mubr.f32.mxu0 0.0
        %1024 = vmatmul.mubr.f32.gmra.mrb[0].mxu0 %v954
        %v1025 = vpop.f32.mrb[0].mxu0
        %v1026 = vadd.f32 %v935, %v1025
        %v1027 = vpop.f32.mrb[0].mxu0
        %1028 = vmatprep.mubr.f32.mxu0 0.0
        %1029 = vmatmul.mubr.f32.gmra.mrb[0].mxu0 %v957
        %v1030 = vpop.f32.mrb[0].mxu0
        %v1031 = vadd.f32 %v940, %v1030
        %v1032 = vpop.f32.mrb[0].mxu0
        %1033 = vdwg.mxu0
        %v1035 = vsel %vm952, %v384, 0
        %v1038 = vsel %vm952, %v385, 0
        %1040 = vmatprep.subr.mxu0 0.0
        %1041 = vmatpush1.msra.mxu0 %v927
        %1042 = vmatprep.subr.mxu0 0.0
        %1043 = vmatpush1.msra.mxu0 %v929
        %1044 = vmatprep.subr.mxu0 0.0
        %1045 = vmatpush1.msra.mxu0 0.0
        %1046 = vmatprep.subr.mxu0 0.0
        %1047 = vmatpush1.msra.mxu0 0.0
        %1048 = vmatprep.subr.mxu0 0.0
        %1049 = vmatpush1.msra.mxu0 0.0
        %1050 = vmatprep.subr.mxu0 0.0
        %1051 = vmatpush1.msra.mxu0 0.0
        %1052 = vmatprep.subr.mxu0 0.0
        %1053 = vmatpush1.msra.mxu0 0.0
        %1054 = vmatprep.subr.mxu0 0.0
        %1055 = vmatpush1.msra.mxu0 0.0
        %1056 = vmatprep.subr.mxu0 0.0
        %1057 = vmatpush1.msra.mxu0 0.0
        %1058 = vmatprep.subr.mxu0 0.0
        %1059 = vmatpush1.msra.mxu0 0.0
        %1060 = vmatprep.subr.mxu0 0.0
        %1061 = vmatpush1.msra.mxu0 0.0
        %1062 = vmatprep.subr.mxu0 0.0
        %1063 = vmatpush1.msra.mxu0 0.0
        %1064 = vmatprep.subr.mxu0 0.0
        %1065 = vmatpush1.msra.mxu0 0.0
        %1066 = vmatprep.subr.mxu0 0.0
        %1067 = vmatpush1.msra.mxu0 0.0
        %1068 = vmatprep.subr.mxu0 0.0
        %1069 = vmatpush1.msra.mxu0 0.0
        %1070 = vmatprep.subr.mxu0 0.0
        %1071 = vmatpush1.msra.mxu0 0.0
        %1072 = vmatprep.subr.mxu0 0.0
        %1073 = vmatpush1.msra.mxu0 0.0
        %1074 = vmatprep.subr.mxu0 0.0
        %1075 = vmatpush1.msra.mxu0 0.0
        %1076 = vmatprep.subr.mxu0 0.0
        %1077 = vmatpush1.msra.mxu0 0.0
        %1078 = vmatprep.subr.mxu0 0.0
        %1079 = vmatpush1.msra.mxu0 0.0
        %1080 = vmatprep.subr.mxu0 0.0
        %1081 = vmatpush1.msra.mxu0 0.0
        %1082 = vmatprep.subr.mxu0 0.0
        %1083 = vmatpush1.msra.mxu0 0.0
        %1084 = vmatprep.subr.mxu0 0.0
        %1085 = vmatpush1.msra.mxu0 0.0
        %1086 = vmatprep.subr.mxu0 0.0
        %1087 = vmatpush1.msra.mxu0 0.0
        %1088 = vmatprep.subr.mxu0 0.0
        %1089 = vmatpush1.msra.mxu0 0.0
        %1090 = vmatprep.subr.mxu0 0.0
        %1091 = vmatpush1.msra.mxu0 0.0
        %1092 = vmatprep.subr.mxu0 0.0
        %1093 = vmatpush1.msra.mxu0 0.0
        %1094 = vmatprep.subr.mxu0 0.0
        %1095 = vmatpush1.msra.mxu0 0.0
        %1096 = vmatprep.subr.mxu0 0.0
        %1097 = vmatpush1.msra.mxu0 0.0
        %1098 = vmatprep.subr.mxu0 0.0
        %1099 = vmatpush1.msra.mxu0 0.0
        %1100 = vmatprep.subr.mxu0 0.0
        %1101 = vmatpush1.msra.mxu0 0.0
        %1102 = vmatprep.subr.mxu0 0.0
        %1103 = vmatpush1.msra.mxu0 0.0
        %1104 = vmatprep.mubr.f32.mxu0 0.0
        %1105 = vmatmul.mubr.f32.gmra.mrb[0].mxu0 %v1035
        %v1106 = vpop.f32.mrb[0].mxu0
        %v1107 = vadd.f32 %v945, %v1106
        %v1108 = vpop.f32.mrb[0].mxu0
        %1109 = vmatprep.mubr.f32.mxu0 0.0
        %1110 = vmatmul.mubr.f32.gmra.mrb[0].mxu0 %v1038
        %v1111 = vpop.f32.mrb[0].mxu0
        %v1112 = vadd.f32 %v950, %v1111
        %v1113 = vpop.f32.mrb[0].mxu0
        %1114 = vdwg.mxu0
        %1115 = vst.msk [vmem:[%s366] sm:$0xff] %vm952, %v1026
        %1116 = vst.msk [vmem:[%s366 + $0x8] sm:$0xff] %vm952, %v1031
        %v1117 = vmul.f32 %v1026, %v426
        %v1118 = vmul.f32 %v1031, %v427
        %1119 = vst.msk [vmem:[%s359] sm:$0xff] %vm952, %v1117
        %1120 = vst.msk [vmem:[%s359 + $0x8] sm:$0xff] %vm952, %v1118
        %1123 = vrot.lane.b32.xlu0 %v1107, 16
        %v1124 = vpop.permute.xlu0 %1123
        %1125 = vrot.lane.b32.xlu0 %v1112, 16
        %v1126 = vpop.permute.xlu0 %1125
        %vm1129 = vcmask 261248
        %1130 = vst.msk [vmem:[%s366] sm:$0xff] %vm1129, %v1124
        %1131 = vst.msk [vmem:[%s366 + $0x8] sm:$0xff] %vm1129, %v1126
        %1134 = vrot.lane.b32.xlu0 %v426, 112
        %v1135 = vpop.permute.xlu0 %1134
        %1136 = vrot.lane.b32.xlu0 %v427, 112
        %v1137 = vpop.permute.xlu0 %1136
        %v1140 = vmul.f32 %v1107, %v1135
        %v1141 = vmul.f32 %v1112, %v1137
        %1144 = vrot.lane.b32.xlu0 %v1140, 16
        %v1145 = vpop.permute.xlu0 %1144
        %1146 = vrot.lane.b32.xlu0 %v1141, 16
        %v1147 = vpop.permute.xlu0 %1146
        %1150 = vst.msk [vmem:[%s359] sm:$0xff] %vm1129, %v1145
        %1151 = vst.msk [vmem:[%s359 + $0x8] sm:$0xff] %vm1129, %v1147
        %s1152 = sand.u32 %s218, 1
        %s1153 = scalar_lea.sflag [#allocation3], %s1152
        %s1154 = sand.u32 %s218, 1
        %s1155 = smul.addr %s1154, 16
        %s1156 = scalar_lea.vmem [#allocation2], %s1155
        %s1157 = sand.u32 %s244, 1
        %s1158 = scalar_lea.sflag [#allocation5], %s1157
        %s1159 = sand.u32 %s244, 1
        %s1160 = smul.addr %s1159, 16
        %s1161 = scalar_lea.vmem [#allocation4], %s1160
        // Predicated region
        $region53: #{tpu_custom_call.1} parent=51 // pred_check
          %p1162 = pneg %p228
        $region54: #{tpu_custom_call.1} parent=51 // pred_check_branch
          %1164 = sbr.rel (%p1162) target = $region56
        $region55: #{tpu_custom_call.1} parent=51 // pred_region
          %s1166 = ssub.s32 256, 256
          %1167 = vsyncadd %s1153, %s1166
          %s1168 = smul.addr %s27, 2
          %s1169 = smul.addr %s1168, 128
          %s1170 = scalar_lea.hbm %s8, %s1169
          %s1171 = sshll.u32 %s1156, 4
          %s1172 = int_to_ptr.vmem [resolvable:$true] %s1171
          %1177 = dma.vmem_to_hbm [thread:$0]  %s1172, 256, %s1170, %s1153, 128, 128, 8
        $region56: #{tpu_custom_call.1} parent=51 // pred_fallthru
          _
        // Predicated region
        $region57: #{tpu_custom_call.1} parent=51 // pred_check
          %p1178 = pneg %p254
        $region58: #{tpu_custom_call.1} parent=51 // pred_check_branch
          %1180 = sbr.rel (%p1178) target = $region60
        $region59: #{tpu_custom_call.1} parent=51 // pred_region
          %s1182 = ssub.s32 256, 256
          %1183 = vsyncadd %s1158, %s1182
          %s1184 = smul.addr %s27, 2
          %s1185 = smul.addr %s1184, 128
          %s1186 = scalar_lea.hbm %s9, %s1185
          %s1187 = sshll.u32 %s1161, 4
          %s1188 = int_to_ptr.vmem [resolvable:$true] %s1187
          %1193 = dma.vmem_to_hbm [thread:$0]  %s1188, 256, %s1186, %s1158, 128, 128, 8
        $region60: #{tpu_custom_call.1} parent=51 // pred_fallthru
          _
      $region52: #{tpu_custom_call.1} parent=5 // pred_fallthru
        _
      %p1194 = scmp.le.s32.totalorder 2, %s22
      // Predicated region
      $region61: #{tpu_custom_call.1} parent=5 // pred_check
        %p1195 = pneg %p1194
      $region62: #{tpu_custom_call.1} parent=5 // pred_check_branch
        %1197 = sbr.rel (%p1195) target = $region64
      $region63: #{tpu_custom_call.1} parent=5 // pred_region
        %s1198 = ssub.s32 %s22, 2
        // Predicated region
        $region65: #{tpu_custom_call.1} parent=63 // pred_check
          %p1199 = pneg %p234
        $region66: #{tpu_custom_call.1} parent=63 // pred_check_branch
          %1201 = sbr.rel (%p1199) target = $region68
        $region67: #{tpu_custom_call.1} parent=63 // pred_region
          %s1202 = sand.u32 %s219, 1
          %s1203 = scalar_lea.sflag [#allocation3], %s1202
          %s1204 = sand.u32 %s219, 1
          %s1205 = smul.addr %s1204, 16
          %s1206 = scalar_lea.vmem [#allocation2], %s1205
          %1207 = dma.done %s1203, 256
        $region68: #{tpu_custom_call.1} parent=63 // pred_fallthru
          _
        // Predicated region
        $region69: #{tpu_custom_call.1} parent=63 // pred_check
          %p1208 = pneg %p260
        $region70: #{tpu_custom_call.1} parent=63 // pred_check_branch
          %1210 = sbr.rel (%p1208) target = $region72
        $region71: #{tpu_custom_call.1} parent=63 // pred_region
          %s1211 = sand.u32 %s245, 1
          %s1212 = scalar_lea.sflag [#allocation5], %s1211
          %s1213 = sand.u32 %s245, 1
          %s1214 = smul.addr %s1213, 16
          %s1215 = scalar_lea.vmem [#allocation4], %s1214
          %1216 = dma.done %s1212, 256
        $region72: #{tpu_custom_call.1} parent=63 // pred_fallthru
          _
      $region64: #{tpu_custom_call.1} parent=5 // pred_fallthru
        _
    $region6: #{tpu_custom_call.1} parent=1 // loop_footer
      %s26 = sadd.s32 1, %s22
    $region7: #{tpu_custom_call.1} parent=1 // loop_footer_branch
      %21 = sbr.rel target = $region3
    $region8: #{tpu_custom_call.1} parent=1 // loop_exit
      _
    %1217 = vsyncpa [#allocation3], 1
    %s1218 = scalar_lea.sflag [#allocation3], 1
    %1219 = vsyncpa %s1218, 1
    %1220 = vsyncpa [#allocation5], 1
    %s1221 = scalar_lea.sflag [#allocation5], 1
    %1222 = vsyncpa %s1221, 1

</llo_original>
